<compile_context>
chip_gen: v6e
topology: v6e:2x2x1
jax: 0.10.0
libtpu: 0.0.40
codegen_flags: <defaults>
</compile_context>

<pallas_src>
import jax
import jax.numpy as jnp
from jax.experimental import pallas as pl
from jax.experimental.pallas import tpu as pltpu


def _mish(x, out_dtype=jnp.float32):
    # Mish(x) = x * tanh(softplus(x)) = x * (e^2 + 2e) / (e^2 + 2e + 2), e = exp(x).
    # Single EUP exp + approx reciprocal; clamp keeps e^2 finite in f32.
    e = jnp.exp(jnp.minimum(x, 40.0))
    n = e * (e + 2.0)
    return (x * n * pl.reciprocal(n + 2.0, approx=True)).astype(out_dtype)


def critic_kernel(
    state_ref, action_ref,
    w1_ref, b1_ref,                      # layer 1, fused heads: (S+A, 2H) bf16, (1, 2H) f32
    w2a_ref, b2a_ref, w2b_ref, b2b_ref,  # layer 2 per head
    w3a_ref, b3a_ref, w3b_ref, b3b_ref,  # layer 3 per head
    w4_ref, b4_ref,                      # final layer packed: (2, H) f32, (2, 1) f32
    out_ref,                             # (2, tm): row 0 = q1, row 1 = q2 (lane-dense)
):
    H = w2a_ref.shape[0]

    # Layer 1: concat state/action along lanes (S+A is tiny) -> single MXU pass.
    x = jnp.concatenate(
        [state_ref[...].astype(jnp.bfloat16), action_ref[...].astype(jnp.bfloat16)],
        axis=-1)
    h = jnp.dot(x, w1_ref[...], preferred_element_type=jnp.float32) + b1_ref[...]
    h = _mish(h, jnp.bfloat16)           # bf16: feeds the next matmul directly
    h1 = h[:, :H]
    h2 = h[:, H:]

    def layer(x_bf16, w_ref, b_ref, out_dtype):
        y = jnp.dot(x_bf16, w_ref[...], preferred_element_type=jnp.float32) + b_ref[...]
        return _mish(y, out_dtype)

    h1 = layer(h1, w2a_ref, b2a_ref, jnp.bfloat16)
    h2 = layer(h2, w2b_ref, b2b_ref, jnp.bfloat16)
    h1 = layer(h1, w3a_ref, b3a_ref, jnp.float32)    # f32 for the final reduce
    h2 = layer(h2, w3b_ref, b3b_ref, jnp.float32)

    # Final (H -> 1) layers as transposed-RHS matmuls so the result lands with
    # batch on lanes: (1, H) . (tm, H)^T -> (1, tm).  Output block is lane-dense.
    dn = (((1,), (1,)), ((), ()))
    q1 = jax.lax.dot_general(w4_ref[0:1, :], h1, dn, preferred_element_type=jnp.float32)
    q2 = jax.lax.dot_general(w4_ref[1:2, :], h2, dn, preferred_element_type=jnp.float32)
    out_ref[...] = (jnp.concatenate([q1, q2], axis=0) + b4_ref[...]).astype(out_ref.dtype)


def _round_up(x, m):
    return ((x + m - 1) // m) * m


def _pick_block_m(batch):
    """Pick the batch tile from the actual hardware (VMEM capacity / device kind)."""
    vmem_bytes = None
    try:
        vmem_bytes = int(pltpu.get_tpu_info().vmem_capacity_bytes)
    except Exception:
        pass
    kind = ""
    try:
        kind = jax.devices()[0].device_kind.lower()
    except Exception:
        pass

    # Only v5e wants a smaller tile; v5p falls through to the big-tile default.
    is_v5e = ("v5e" in kind) or ("v5 lite" in kind) or ("v5litepod" in kind)
    row_target = 512 if is_v5e else 1024

    # v7x: 2 TensorCores per chip (and 64 MiB VMEM per TC).
    two_tc = ("v7" in kind) or (vmem_bytes is not None and vmem_bytes <= 80 * 1024 * 1024)

    if batch <= row_target:
        block_m = batch                   # full-batch tile (full-dim blocks always legal)
        if two_tc and batch > 512:
            # Guarantee >= 2 tiles so the "parallel" axis feeds both TensorCores.
            block_m = _round_up(pl.cdiv(batch, 2), 128)
    else:
        block_m = row_target              # multiple of (8, 128) by construction
    return block_m


def critic_forward(state, action, params, *, block_m=None):
    """Pallas equivalent of Critic.forward(state, action) -> (q1, q2)."""
    B, S = state.shape
    A = action.shape[1]
    (w1, b1, w2a, b2a, w2b, b2b, w3a, b3a, w3b, b3b, w4, b4) = params
    H = w2a.shape[0]

    if block_m is None:
        block_m = _pick_block_m(B)

    grid = (pl.cdiv(B, block_m),)

    # Grid-invariant weights: if H is scaled up, single-buffer them and raise the
    # scoped-VMEM limit so v7x (64 MiB physical, 32 MiB scoped default) still fits.
    weight_kw = {}
    vmem_limit = None
    if H >= 512:
        weight_kw = dict(pipeline_mode=pl.Buffered(1))
        vmem_limit = 64 * 1024 * 1024

    def batch_spec(cols):
        return pl.BlockSpec((block_m, cols), lambda i: (i, 0))

    def resident_spec(arr):
        # Full-array block, same block index every step -> stays VMEM-resident.
        return pl.BlockSpec(arr.shape, lambda i: (0, 0), **weight_kw)

    in_specs = [
        batch_spec(S), batch_spec(A),
        resident_spec(w1), resident_spec(b1),
        resident_spec(w2a), resident_spec(b2a), resident_spec(w2b), resident_spec(b2b),
        resident_spec(w3a), resident_spec(b3a), resident_spec(w3b), resident_spec(b3b),
        resident_spec(w4), resident_spec(b4),
    ]
    # Lane-dense output: (2, B) with batch on lanes -> unmasked full-lane stores.
    out_spec = pl.BlockSpec((2, block_m), lambda i: (0, i))

    param_bytes = sum(int(p.size) * int(p.dtype.itemsize) for p in params)
    cost = pl.CostEstimate(
        flops=int(2 * 2 * B * H * (S + A + 2 * H + 1)),
        transcendentals=int(2 * 3 * 2 * B * H),      # exp + recip per mish element
        bytes_accessed=int(param_bytes + 4 * (state.size + action.size + 2 * B)),
    )

    out = pl.pallas_call(
        critic_kernel,
        out_shape=jax.ShapeDtypeStruct((2, B), jnp.float32),
        grid=grid,
        in_specs=in_specs,
        out_specs=out_spec,
        compiler_params=pltpu.CompilerParams(
            dimension_semantics=("parallel",),       # megacore split on v7x
            vmem_limit_bytes=vmem_limit,
        ),
        cost_estimate=cost,
    )(state, action, *params)

    q = out.T                                        # (B, 2)
    return q[:, 0:1], q[:, 1:2]


def critic_q1(state, action, params):
    q1, _ = critic_forward(state, action, params)
    return q1


def critic_q_min(state, action, params):
    q1, q2 = critic_forward(state, action, params)
    return jnp.minimum(q1, q2)


def init_critic_params(key, state_dim, action_dim, hidden_dim=256):
    """PyTorch nn.Linear-style init (uniform +/- 1/sqrt(fan_in)), packed for the kernel.

    Packing:
      w1 (S+A, 2H) bf16, b1 (1, 2H) f32                 -- layer 1 fused over both heads
      w2*/w3* (H, H) bf16, b2*/b3* (1, H) f32            -- per head
      w4 (2, H) f32 (row 0 = q1, row 1 = q2), b4 (2, 1)  -- final heads, lane-dense reduce
    """
    in_dim = state_dim + action_dim
    dims = [(in_dim, hidden_dim), (hidden_dim, hidden_dim),
            (hidden_dim, hidden_dim), (hidden_dim, 1)]

    heads = []
    for _head in range(2):
        layers = []
        for (fi, fo) in dims:
            key, kw, kb = jax.random.split(key, 3)
            bound = 1.0 / (fi ** 0.5)
            w = jax.random.uniform(kw, (fi, fo), jnp.float32, minval=-bound, maxval=bound)
            b = jax.random.uniform(kb, (1, fo), jnp.float32, minval=-bound, maxval=bound)
            layers.append((w, b))
        heads.append(layers)

    (w1_1, b1_1), (w2_1, b2_1), (w3_1, b3_1), (w4_1, b4_1) = heads[0]
    (w1_2, b1_2), (w2_2, b2_2), (w3_2, b3_2), (w4_2, b4_2) = heads[1]

    bf16 = jnp.bfloat16
    params = (
        jnp.concatenate([w1_1, w1_2], axis=1).astype(bf16),   # w1 (S+A, 2H)
        jnp.concatenate([b1_1, b1_2], axis=1),                # b1 (1, 2H) f32
        w2_1.astype(bf16), b2_1, w2_2.astype(bf16), b2_2,
        w3_1.astype(bf16), b3_1, w3_2.astype(bf16), b3_2,
        jnp.concatenate([w4_1.T, w4_2.T], axis=0),            # w4 (2, H) f32
        jnp.concatenate([b4_1, b4_2], axis=0),                # b4 (2, 1) f32
    )
    return params


def _reference_forward(state, action, params):
    """Pure-JAX reference (same bf16 weights / bf16 matmul inputs, exact Mish)."""
    (w1, b1, w2a, b2a, w2b, b2b, w3a, b3a, w3b, b3b, w4, b4) = params
    H = w2a.shape[0]

    def mm(x, w):
        return jnp.dot(x.astype(jnp.bfloat16), w, preferred_element_type=jnp.float32)

    def mish(x):
        return x * jnp.tanh(jax.nn.softplus(x))

    x = jnp.concatenate([state, action], axis=-1)
    h = mish(mm(x, w1) + b1)
    h1, h2 = h[:, :H], h[:, H:]
    h1 = mish(mm(h1, w2a) + b2a)
    h2 = mish(mm(h2, w2b) + b2b)
    h1 = mish(mm(h1, w3a) + b3a)
    h2 = mish(mm(h2, w3b) + b3b)
    q1 = h1 @ w4[0:1, :].T + b4[0, 0]
    q2 = h2 @ w4[1:2, :].T + b4[1, 0]
    return q1, q2


if __name__ == "__main__":
    key = jax.random.PRNGKey(0)

    batch = 8
    state_dim = 12
    action_dim = 4
    hidden_dim = 32

    k_params, k_state, k_action, k_state2, k_action2 = jax.random.split(key, 5)
    params = init_critic_params(k_params, state_dim, action_dim, hidden_dim)

    state = jax.random.normal(k_state, (batch, state_dim), jnp.float32)
    action = jax.random.normal(k_action, (batch, action_dim), jnp.float32)

    q1, q2 = critic_forward(state, action, params)
    jax.block_until_ready((q1, q2))

    q1_ref, q2_ref = _reference_forward(state, action, params)
    assert q1.shape == (batch, 1) and q2.shape == (batch, 1)
    assert jnp.allclose(q1, q1_ref, atol=1e-2, rtol=1e-2)
    assert jnp.allclose(q2, q2_ref, atol=1e-2, rtol=1e-2)

    # Also exercise the multi-tile (grid > 1) + lane-dense store path.
    B2 = 256
    state2 = jax.random.normal(k_state2, (B2, state_dim), jnp.float32)
    action2 = jax.random.normal(k_action2, (B2, action_dim), jnp.float32)
    q1b, q2b = critic_forward(state2, action2, params, block_m=128)
    jax.block_until_ready((q1b, q2b))
    q1b_ref, q2b_ref = _reference_forward(state2, action2, params)
    assert jnp.allclose(q1b, q1b_ref, atol=1e-2, rtol=1e-2)
    assert jnp.allclose(q2b, q2b_ref, atol=1e-2, rtol=1e-2)

    # q_min sanity
    qmin = critic_q_min(state, action, params)
    assert qmin.shape == (batch, 1)

    print("KERNEL_OK")
</pallas_src>

<mosaic_0001>
module attributes {stable_mosaic.version = 11 : i64} {
  func.func @critic_kernel(%arg0: i32, %arg1: memref<8x12xf32, #tpu.memory_space<vmem>>, %arg2: memref<8x4xf32, #tpu.memory_space<vmem>>, %arg3: memref<16x64xbf16, #tpu.memory_space<vmem>>, %arg4: memref<1x64xf32, #tpu.memory_space<vmem>>, %arg5: memref<32x32xbf16, #tpu.memory_space<vmem>>, %arg6: memref<1x32xf32, #tpu.memory_space<vmem>>, %arg7: memref<32x32xbf16, #tpu.memory_space<vmem>>, %arg8: memref<1x32xf32, #tpu.memory_space<vmem>>, %arg9: memref<32x32xbf16, #tpu.memory_space<vmem>>, %arg10: memref<1x32xf32, #tpu.memory_space<vmem>>, %arg11: memref<32x32xbf16, #tpu.memory_space<vmem>>, %arg12: memref<1x32xf32, #tpu.memory_space<vmem>>, %arg13: memref<2x32xf32, #tpu.memory_space<vmem>>, %arg14: memref<2x1xf32, #tpu.memory_space<vmem>>, %arg15: memref<2x8xf32, #tpu.memory_space<vmem>>) attributes {dimension_semantics = [#tpu.dimension_semantics<parallel>], iteration_bounds = array<i64: 1>, scalar_prefetch = 0 : i64, scratch_operands = 0 : i64, tpu.core_type = #tpu.core_type<tc>, window_params = [{transform_indices = @transform_0, window_bounds = array<i64: 8, 12>}, {transform_indices = @transform_1, window_bounds = array<i64: 8, 4>}, {pipeline_mode = #tpu.pipeline_mode<synchronous>, transform_indices = @transform_2, window_bounds = array<i64: 16, 64>}, {pipeline_mode = #tpu.pipeline_mode<synchronous>, transform_indices = @transform_3, window_bounds = array<i64: 1, 64>}, {pipeline_mode = #tpu.pipeline_mode<synchronous>, transform_indices = @transform_4, window_bounds = array<i64: 32, 32>}, {pipeline_mode = #tpu.pipeline_mode<synchronous>, transform_indices = @transform_5, window_bounds = array<i64: 1, 32>}, {pipeline_mode = #tpu.pipeline_mode<synchronous>, transform_indices = @transform_6, window_bounds = array<i64: 32, 32>}, {pipeline_mode = #tpu.pipeline_mode<synchronous>, transform_indices = @transform_7, window_bounds = array<i64: 1, 32>}, {pipeline_mode = #tpu.pipeline_mode<synchronous>, transform_indices = @transform_8, window_bounds = array<i64: 32, 32>}, {pipeline_mode = #tpu.pipeline_mode<synchronous>, transform_indices = @transform_9, window_bounds = array<i64: 1, 32>}, {pipeline_mode = #tpu.pipeline_mode<synchronous>, transform_indices = @transform_10, window_bounds = array<i64: 32, 32>}, {pipeline_mode = #tpu.pipeline_mode<synchronous>, transform_indices = @transform_11, window_bounds = array<i64: 1, 32>}, {pipeline_mode = #tpu.pipeline_mode<synchronous>, transform_indices = @transform_12, window_bounds = array<i64: 2, 32>}, {pipeline_mode = #tpu.pipeline_mode<synchronous>, transform_indices = @transform_13, window_bounds = array<i64: 2, 1>}, {transform_indices = @transform_14, window_bounds = array<i64: 2, 8>}]} {
    %c0 = arith.constant 0 : index
    %c0_0 = arith.constant 0 : index
    %0 = vector.load %arg1[%c0, %c0_0] : memref<8x12xf32, #tpu.memory_space<vmem>>, vector<8x12xf32>
    %1 = arith.truncf %0 : vector<8x12xf32> to vector<8x12xbf16>
    %c0_1 = arith.constant 0 : index
    %c0_2 = arith.constant 0 : index
    %2 = vector.load %arg2[%c0_1, %c0_2] : memref<8x4xf32, #tpu.memory_space<vmem>>, vector<8x4xf32>
    %3 = arith.truncf %2 : vector<8x4xf32> to vector<8x4xbf16>
    %4 = tpu.concatenate %1, %3 in 1 : vector<8x12xbf16>, vector<8x4xbf16> -> vector<8x16xbf16>
    %c0_3 = arith.constant 0 : index
    %c0_4 = arith.constant 0 : index
    %5 = vector.load %arg3[%c0_3, %c0_4] : memref<16x64xbf16, #tpu.memory_space<vmem>>, vector<16x64xbf16>
    %cst = arith.constant dense<0.000000e+00> : vector<8x64xf32>
    %6 = tpu.matmul %4, %5, %cst {dimension_numbers = #tpu.dot_dimension_numbers<[1], [0], [0], [1], [0, 0, 1, 1], [], []>} : vector<8x16xbf16>, vector<16x64xbf16>, vector<8x64xf32> -> vector<8x64xf32>
    %c0_5 = arith.constant 0 : index
    %c0_6 = arith.constant 0 : index
    %7 = vector.load %arg4[%c0_5, %c0_6] : memref<1x64xf32, #tpu.memory_space<vmem>>, vector<1x64xf32>
    %8 = vector.broadcast %7 : vector<1x64xf32> to vector<8x64xf32>
    %9 = arith.addf %6, %8 : vector<8x64xf32>
    %cst_7 = arith.constant 4.000000e+01 : f32
    %10 = vector.broadcast %cst_7 : f32 to vector<8x64xf32>
    %11 = arith.minimumf %9, %10 : vector<8x64xf32>
    %12 = math.exp %11 : vector<8x64xf32>
    %cst_8 = arith.constant 2.000000e+00 : f32
    %13 = vector.broadcast %cst_8 : f32 to vector<8x64xf32>
    %14 = arith.addf %12, %13 : vector<8x64xf32>
    %15 = arith.mulf %12, %14 : vector<8x64xf32>
    %16 = arith.mulf %9, %15 : vector<8x64xf32>
    %cst_9 = arith.constant 2.000000e+00 : f32
    %17 = vector.broadcast %cst_9 : f32 to vector<8x64xf32>
    %18 = arith.addf %15, %17 : vector<8x64xf32>
    %19 = tpu.reciprocal %18 {approx = true} : vector<8x64xf32> -> vector<8x64xf32>
    %20 = arith.mulf %16, %19 : vector<8x64xf32>
    %21 = arith.truncf %20 : vector<8x64xf32> to vector<8x64xbf16>
    %22 = vector.extract_strided_slice %21 {offsets = [0, 0], sizes = [8, 32], strides = [1, 1]} : vector<8x64xbf16> to vector<8x32xbf16>
    %23 = vector.extract_strided_slice %21 {offsets = [0, 32], sizes = [8, 32], strides = [1, 1]} : vector<8x64xbf16> to vector<8x32xbf16>
    %c0_10 = arith.constant 0 : index
    %c0_11 = arith.constant 0 : index
    %24 = vector.load %arg5[%c0_10, %c0_11] : memref<32x32xbf16, #tpu.memory_space<vmem>>, vector<32x32xbf16>
    %cst_12 = arith.constant dense<0.000000e+00> : vector<8x32xf32>
    %25 = tpu.matmul %22, %24, %cst_12 {dimension_numbers = #tpu.dot_dimension_numbers<[1], [0], [0], [1], [0, 0, 1, 1], [], []>} : vector<8x32xbf16>, vector<32x32xbf16>, vector<8x32xf32> -> vector<8x32xf32>
    %c0_13 = arith.constant 0 : index
    %c0_14 = arith.constant 0 : index
    %26 = vector.load %arg6[%c0_13, %c0_14] : memref<1x32xf32, #tpu.memory_space<vmem>>, vector<1x32xf32>
    %27 = vector.broadcast %26 : vector<1x32xf32> to vector<8x32xf32>
    %28 = arith.addf %25, %27 : vector<8x32xf32>
    %cst_15 = arith.constant 4.000000e+01 : f32
    %29 = vector.broadcast %cst_15 : f32 to vector<8x32xf32>
    %30 = arith.minimumf %28, %29 : vector<8x32xf32>
    %31 = math.exp %30 : vector<8x32xf32>
    %cst_16 = arith.constant 2.000000e+00 : f32
    %32 = vector.broadcast %cst_16 : f32 to vector<8x32xf32>
    %33 = arith.addf %31, %32 : vector<8x32xf32>
    %34 = arith.mulf %31, %33 : vector<8x32xf32>
    %35 = arith.mulf %28, %34 : vector<8x32xf32>
    %cst_17 = arith.constant 2.000000e+00 : f32
    %36 = vector.broadcast %cst_17 : f32 to vector<8x32xf32>
    %37 = arith.addf %34, %36 : vector<8x32xf32>
    %38 = tpu.reciprocal %37 {approx = true} : vector<8x32xf32> -> vector<8x32xf32>
    %39 = arith.mulf %35, %38 : vector<8x32xf32>
    %40 = arith.truncf %39 : vector<8x32xf32> to vector<8x32xbf16>
    %c0_18 = arith.constant 0 : index
    %c0_19 = arith.constant 0 : index
    %41 = vector.load %arg7[%c0_18, %c0_19] : memref<32x32xbf16, #tpu.memory_space<vmem>>, vector<32x32xbf16>
    %cst_20 = arith.constant dense<0.000000e+00> : vector<8x32xf32>
    %42 = tpu.matmul %23, %41, %cst_20 {dimension_numbers = #tpu.dot_dimension_numbers<[1], [0], [0], [1], [0, 0, 1, 1], [], []>} : vector<8x32xbf16>, vector<32x32xbf16>, vector<8x32xf32> -> vector<8x32xf32>
    %c0_21 = arith.constant 0 : index
    %c0_22 = arith.constant 0 : index
    %43 = vector.load %arg8[%c0_21, %c0_22] : memref<1x32xf32, #tpu.memory_space<vmem>>, vector<1x32xf32>
    %44 = vector.broadcast %43 : vector<1x32xf32> to vector<8x32xf32>
    %45 = arith.addf %42, %44 : vector<8x32xf32>
    %cst_23 = arith.constant 4.000000e+01 : f32
    %46 = vector.broadcast %cst_23 : f32 to vector<8x32xf32>
    %47 = arith.minimumf %45, %46 : vector<8x32xf32>
    %48 = math.exp %47 : vector<8x32xf32>
    %cst_24 = arith.constant 2.000000e+00 : f32
    %49 = vector.broadcast %cst_24 : f32 to vector<8x32xf32>
    %50 = arith.addf %48, %49 : vector<8x32xf32>
    %51 = arith.mulf %48, %50 : vector<8x32xf32>
    %52 = arith.mulf %45, %51 : vector<8x32xf32>
    %cst_25 = arith.constant 2.000000e+00 : f32
    %53 = vector.broadcast %cst_25 : f32 to vector<8x32xf32>
    %54 = arith.addf %51, %53 : vector<8x32xf32>
    %55 = tpu.reciprocal %54 {approx = true} : vector<8x32xf32> -> vector<8x32xf32>
    %56 = arith.mulf %52, %55 : vector<8x32xf32>
    %57 = arith.truncf %56 : vector<8x32xf32> to vector<8x32xbf16>
    %c0_26 = arith.constant 0 : index
    %c0_27 = arith.constant 0 : index
    %58 = vector.load %arg9[%c0_26, %c0_27] : memref<32x32xbf16, #tpu.memory_space<vmem>>, vector<32x32xbf16>
    %cst_28 = arith.constant dense<0.000000e+00> : vector<8x32xf32>
    %59 = tpu.matmul %40, %58, %cst_28 {dimension_numbers = #tpu.dot_dimension_numbers<[1], [0], [0], [1], [0, 0, 1, 1], [], []>} : vector<8x32xbf16>, vector<32x32xbf16>, vector<8x32xf32> -> vector<8x32xf32>
    %c0_29 = arith.constant 0 : index
    %c0_30 = arith.constant 0 : index
    %60 = vector.load %arg10[%c0_29, %c0_30] : memref<1x32xf32, #tpu.memory_space<vmem>>, vector<1x32xf32>
    %61 = vector.broadcast %60 : vector<1x32xf32> to vector<8x32xf32>
    %62 = arith.addf %59, %61 : vector<8x32xf32>
    %cst_31 = arith.constant 4.000000e+01 : f32
    %63 = vector.broadcast %cst_31 : f32 to vector<8x32xf32>
    %64 = arith.minimumf %62, %63 : vector<8x32xf32>
    %65 = math.exp %64 : vector<8x32xf32>
    %cst_32 = arith.constant 2.000000e+00 : f32
    %66 = vector.broadcast %cst_32 : f32 to vector<8x32xf32>
    %67 = arith.addf %65, %66 : vector<8x32xf32>
    %68 = arith.mulf %65, %67 : vector<8x32xf32>
    %69 = arith.mulf %62, %68 : vector<8x32xf32>
    %cst_33 = arith.constant 2.000000e+00 : f32
    %70 = vector.broadcast %cst_33 : f32 to vector<8x32xf32>
    %71 = arith.addf %68, %70 : vector<8x32xf32>
    %72 = tpu.reciprocal %71 {approx = true} : vector<8x32xf32> -> vector<8x32xf32>
    %73 = arith.mulf %69, %72 : vector<8x32xf32>
    %c0_34 = arith.constant 0 : index
    %c0_35 = arith.constant 0 : index
    %74 = vector.load %arg11[%c0_34, %c0_35] : memref<32x32xbf16, #tpu.memory_space<vmem>>, vector<32x32xbf16>
    %cst_36 = arith.constant dense<0.000000e+00> : vector<8x32xf32>
    %75 = tpu.matmul %57, %74, %cst_36 {dimension_numbers = #tpu.dot_dimension_numbers<[1], [0], [0], [1], [0, 0, 1, 1], [], []>} : vector<8x32xbf16>, vector<32x32xbf16>, vector<8x32xf32> -> vector<8x32xf32>
    %c0_37 = arith.constant 0 : index
    %c0_38 = arith.constant 0 : index
    %76 = vector.load %arg12[%c0_37, %c0_38] : memref<1x32xf32, #tpu.memory_space<vmem>>, vector<1x32xf32>
    %77 = vector.broadcast %76 : vector<1x32xf32> to vector<8x32xf32>
    %78 = arith.addf %75, %77 : vector<8x32xf32>
    %cst_39 = arith.constant 4.000000e+01 : f32
    %79 = vector.broadcast %cst_39 : f32 to vector<8x32xf32>
    %80 = arith.minimumf %78, %79 : vector<8x32xf32>
    %81 = math.exp %80 : vector<8x32xf32>
    %cst_40 = arith.constant 2.000000e+00 : f32
    %82 = vector.broadcast %cst_40 : f32 to vector<8x32xf32>
    %83 = arith.addf %81, %82 : vector<8x32xf32>
    %84 = arith.mulf %81, %83 : vector<8x32xf32>
    %85 = arith.mulf %78, %84 : vector<8x32xf32>
    %cst_41 = arith.constant 2.000000e+00 : f32
    %86 = vector.broadcast %cst_41 : f32 to vector<8x32xf32>
    %87 = arith.addf %84, %86 : vector<8x32xf32>
    %88 = tpu.reciprocal %87 {approx = true} : vector<8x32xf32> -> vector<8x32xf32>
    %89 = arith.mulf %85, %88 : vector<8x32xf32>
    %c0_42 = arith.constant 0 : index
    %c0_43 = arith.constant 0 : index
    %90 = vector.load %arg13[%c0_42, %c0_43] : memref<2x32xf32, #tpu.memory_space<vmem>>, vector<1x32xf32>
    %cst_44 = arith.constant dense<0.000000e+00> : vector<1x8xf32>
    %91 = tpu.matmul %90, %73, %cst_44 {dimension_numbers = #tpu.dot_dimension_numbers<[1], [1], [0], [0], [0, 0, 1, 0], [], []>} : vector<1x32xf32>, vector<8x32xf32>, vector<1x8xf32> -> vector<1x8xf32>
    %c1 = arith.constant 1 : index
    %c0_45 = arith.constant 0 : index
    %92 = vector.load %arg13[%c1, %c0_45] : memref<2x32xf32, #tpu.memory_space<vmem>>, vector<1x32xf32>
    %cst_46 = arith.constant dense<0.000000e+00> : vector<1x8xf32>
    %93 = tpu.matmul %92, %89, %cst_46 {dimension_numbers = #tpu.dot_dimension_numbers<[1], [1], [0], [0], [0, 0, 1, 0], [], []>} : vector<1x32xf32>, vector<8x32xf32>, vector<1x8xf32> -> vector<1x8xf32>
    %94 = tpu.concatenate %91, %93 in 0 : vector<1x8xf32>, vector<1x8xf32> -> vector<2x8xf32>
    %c0_47 = arith.constant 0 : index
    %c0_48 = arith.constant 0 : index
    %95 = vector.load %arg14[%c0_47, %c0_48] : memref<2x1xf32, #tpu.memory_space<vmem>>, vector<2x1xf32>
    %96 = vector.broadcast %95 : vector<2x1xf32> to vector<2x8xf32>
    %97 = arith.addf %94, %96 : vector<2x8xf32>
    %c0_49 = arith.constant 0 : index
    %c0_50 = arith.constant 0 : index
    %98 = vector.load %arg15[%c0_49, %c0_50] : memref<2x8xf32, #tpu.memory_space<vmem>>, vector<2x8xf32>
    tpu.vector_store %arg15[%c0_49, %c0_50], %97 {strides = array<i32>} : memref<2x8xf32, #tpu.memory_space<vmem>>, vector<2x8xf32>,
    return
  }
  func.func @transform_0(%arg0: i32) -> (i32, i32) {
    %c0_i32 = arith.constant 0 : i32
    %c0_i32_0 = arith.constant 0 : i32
    return %arg0, %c0_i32 : i32, i32
  }
  func.func @transform_1(%arg0: i32) -> (i32, i32) {
    %c0_i32 = arith.constant 0 : i32
    %c0_i32_0 = arith.constant 0 : i32
    return %arg0, %c0_i32 : i32, i32
  }
  func.func @transform_2(%arg0: i32) -> (i32, i32) {
    %c0_i32 = arith.constant 0 : i32
    %c0_i32_0 = arith.constant 0 : i32
    %c0_i32_1 = arith.constant 0 : i32
    return %c0_i32, %c0_i32_0 : i32, i32
  }
  func.func @transform_3(%arg0: i32) -> (i32, i32) {
    %c0_i32 = arith.constant 0 : i32
    %c0_i32_0 = arith.constant 0 : i32
    %c0_i32_1 = arith.constant 0 : i32
    return %c0_i32, %c0_i32_0 : i32, i32
  }
  func.func @transform_4(%arg0: i32) -> (i32, i32) {
    %c0_i32 = arith.constant 0 : i32
    %c0_i32_0 = arith.constant 0 : i32
    %c0_i32_1 = arith.constant 0 : i32
    return %c0_i32, %c0_i32_0 : i32, i32
  }
  func.func @transform_5(%arg0: i32) -> (i32, i32) {
    %c0_i32 = arith.constant 0 : i32
    %c0_i32_0 = arith.constant 0 : i32
    %c0_i32_1 = arith.constant 0 : i32
    return %c0_i32, %c0_i32_0 : i32, i32
  }
  func.func @transform_6(%arg0: i32) -> (i32, i32) {
    %c0_i32 = arith.constant 0 : i32
    %c0_i32_0 = arith.constant 0 : i32
    %c0_i32_1 = arith.constant 0 : i32
    return %c0_i32, %c0_i32_0 : i32, i32
  }
  func.func @transform_7(%arg0: i32) -> (i32, i32) {
    %c0_i32 = arith.constant 0 : i32
    %c0_i32_0 = arith.constant 0 : i32
    %c0_i32_1 = arith.constant 0 : i32
    return %c0_i32, %c0_i32_0 : i32, i32
  }
  func.func @transform_8(%arg0: i32) -> (i32, i32) {
    %c0_i32 = arith.constant 0 : i32
    %c0_i32_0 = arith.constant 0 : i32
    %c0_i32_1 = arith.constant 0 : i32
    return %c0_i32, %c0_i32_0 : i32, i32
  }
  func.func @transform_9(%arg0: i32) -> (i32, i32) {
    %c0_i32 = arith.constant 0 : i32
    %c0_i32_0 = arith.constant 0 : i32
    %c0_i32_1 = arith.constant 0 : i32
    return %c0_i32, %c0_i32_0 : i32, i32
  }
  func.func @transform_10(%arg0: i32) -> (i32, i32) {
    %c0_i32 = arith.constant 0 : i32
    %c0_i32_0 = arith.constant 0 : i32
    %c0_i32_1 = arith.constant 0 : i32
    return %c0_i32, %c0_i32_0 : i32, i32
  }
  func.func @transform_11(%arg0: i32) -> (i32, i32) {
    %c0_i32 = arith.constant 0 : i32
    %c0_i32_0 = arith.constant 0 : i32
    %c0_i32_1 = arith.constant 0 : i32
    return %c0_i32, %c0_i32_0 : i32, i32
  }
  func.func @transform_12(%arg0: i32) -> (i32, i32) {
    %c0_i32 = arith.constant 0 : i32
    %c0_i32_0 = arith.constant 0 : i32
    %c0_i32_1 = arith.constant 0 : i32
    return %c0_i32, %c0_i32_0 : i32, i32
  }
  func.func @transform_13(%arg0: i32) -> (i32, i32) {
    %c0_i32 = arith.constant 0 : i32
    %c0_i32_0 = arith.constant 0 : i32
    %c0_i32_1 = arith.constant 0 : i32
    return %c0_i32, %c0_i32_0 : i32, i32
  }
  func.func @transform_14(%arg0: i32) -> (i32, i32) {
    %c0_i32 = arith.constant 0 : i32
    %c0_i32_0 = arith.constant 0 : i32
    return %c0_i32, %arg0 : i32, i32
  }
}

</mosaic_0001>

<llo_original>
// kernel: tpu_custom_call.1
$region0: #{tpu_custom_call.1}
  #allocation0 [shape = 'u32[]', space=smem, size = 0x4, offset = 0x4, fixed_abs, tag = 'smem constant byte address 0x4 - core index']
  #allocation1 [shape = 'u32[144,128]{1,0:T(1,128)}', space=vmem, size = 0x12000, scoped, tag = 'internal scratch']
  %s0 = inlined_call_operand.hbm [shape: f32[8,12], index: 0, kind: input, shape index: {}]
  %s1 = inlined_call_operand.vmem [shape: f32[8,4], index: 1, kind: input, shape index: {}]
  %s2 = inlined_call_operand.hbm [shape: bf16[16,64], index: 2, kind: input, shape index: {}]
  %s3 = inlined_call_operand.vmem [shape: f32[1,64], index: 3, kind: input, shape index: {}]
  %s4 = inlined_call_operand.vmem [shape: bf16[32,32], index: 4, kind: input, shape index: {}]
  %s5 = inlined_call_operand.hbm [shape: f32[1,32], index: 5, kind: input, shape index: {}]
  %s6 = inlined_call_operand.hbm [shape: bf16[32,32], index: 6, kind: input, shape index: {}]
  %s7 = inlined_call_operand.hbm [shape: f32[1,32], index: 7, kind: input, shape index: {}]
  %s8 = inlined_call_operand.hbm [shape: bf16[32,32], index: 8, kind: input, shape index: {}]
  %s9 = inlined_call_operand.hbm [shape: f32[1,32], index: 9, kind: input, shape index: {}]
  %s10 = inlined_call_operand.vmem [shape: bf16[32,32], index: 10, kind: input, shape index: {}]
  %s11 = inlined_call_operand.hbm [shape: f32[1,32], index: 11, kind: input, shape index: {}]
  %s12 = inlined_call_operand.vmem [shape: f32[2,32], index: 12, kind: input, shape index: {}]
  %s13 = inlined_call_operand.vmem [shape: f32[2,1], index: 13, kind: input, shape index: {}]
  %s14 = inlined_call_operand.hbm [shape: f32[2,8], index: 14, kind: output, shape index: {}]
  %s15 = sld [smem:[#allocation0]]
  $region98: #{tpu_custom_call.1} parent=0
    _
  %s17 = ssub.s32 1, %s15
  %s18 = scalar_select 0, %s17, %s15
  $region1: #{tpu_custom_call.1} parent=0
    #allocation2 [shape = 'u8[4096]{0}', space=vmem, size = 0x1000, scoped, tag = 'input window, operand 0, single buffered']
    #allocation3 [shape = 's32[1]{0}', space=sflag, size = 0x4, scoped, tag = 'scoped memory for tpu_custom_call.1']
    #allocation4 [shape = 's32[1]{0}', space=sflag, size = 0x4, scoped, tag = 'scoped memory for tpu_custom_call.1']
    #allocation5 [shape = 'u8[4096]{0}', space=vmem, size = 0x1000, scoped, tag = 'input window, operand 2, single buffered']
    #allocation6 [shape = 's32[1]{0}', space=sflag, size = 0x4, scoped, tag = 'scoped memory for tpu_custom_call.1']
    #allocation7 [shape = 'u8[512]{0}', space=vmem, size = 0x400, scoped, tag = 'input window, operand 5, single buffered']
    #allocation8 [shape = 'u8[8192]{0}', space=vmem, size = 0x2000, scoped, tag = 'input window, operand 6, single buffered']
    #allocation9 [shape = 's32[1]{0}', space=sflag, size = 0x4, scoped, tag = 'scoped memory for tpu_custom_call.1']
    #allocation10 [shape = 'u8[512]{0}', space=vmem, size = 0x400, scoped, tag = 'input window, operand 7, single buffered']
    #allocation11 [shape = 'u8[8192]{0}', space=vmem, size = 0x2000, scoped, tag = 'input window, operand 8, single buffered']
    #allocation12 [shape = 's32[1]{0}', space=sflag, size = 0x4, scoped, tag = 'scoped memory for tpu_custom_call.1']
    #allocation13 [shape = 'u8[512]{0}', space=vmem, size = 0x400, scoped, tag = 'input window, operand 9, single buffered']
    #allocation14 [shape = 'u8[512]{0}', space=vmem, size = 0x400, scoped, tag = 'input window, operand 11, single buffered']
    #allocation15 [shape = 's32[1]{0}', space=sflag, size = 0x4, scoped, tag = 'scoped memory for tpu_custom_call.1']
    #allocation16 [shape = 'u8[1024]{0}', space=vmem, size = 0x400, scoped, tag = 'output window, operand 0, single buffered']
    %19 = vsyncpa [#allocation3], 0
    %20 = vsyncpa [#allocation6], 0
    %21 = vsyncpa [#allocation9], 0
    %22 = vsyncpa [#allocation12], 0
    %23 = vsyncpa [#allocation15], 0
    %24 = vsyncpa [#allocation4], 0
    // Predicated region
    $region2: #{tpu_custom_call.1} parent=1 // pred_check
      _
    $region3: #{tpu_custom_call.1} parent=1 // pred_check_branch
      %26 = sbr.rel (0) target = $region5
    $region4: #{tpu_custom_call.1} parent=1 // pred_region
      %s28 = ssub.s32 128, 128
      %29 = vsyncadd [#allocation3], %s28
      %s31 = sshll.u32 [#allocation2], 4
      %s32 = int_to_ptr.vmem [resolvable:$true] %s31
      %34 = dma.hbm_to_vmem [thread:$0]  %s0, 128, %s32, [#allocation3]
    $region5: #{tpu_custom_call.1} parent=1 // pred_fallthru
      _
    // Predicated region
    $region6: #{tpu_custom_call.1} parent=1 // pred_check
      _
    $region7: #{tpu_custom_call.1} parent=1 // pred_check_branch
      %36 = sbr.rel (0) target = $region9
    $region8: #{tpu_custom_call.1} parent=1 // pred_region
      _
    $region9: #{tpu_custom_call.1} parent=1 // pred_fallthru
      _
    // Predicated region
    $region10: #{tpu_custom_call.1} parent=1 // pred_check
      _
    $region11: #{tpu_custom_call.1} parent=1 // pred_check_branch
      %38 = sbr.rel (0) target = $region13
    $region12: #{tpu_custom_call.1} parent=1 // pred_region
      %s40 = ssub.s32 128, 128
      %41 = vsyncadd [#allocation6], %s40
      %s42 = sshll.u32 [#allocation5], 4
      %s43 = int_to_ptr.vmem [resolvable:$true] %s42
      %48 = dma.hbm_to_vmem [thread:$0]  %s2, 128, %s43, [#allocation6], 64, 64, 4
    $region13: #{tpu_custom_call.1} parent=1 // pred_fallthru
      _
    // Predicated region
    $region14: #{tpu_custom_call.1} parent=1 // pred_check
      _
    $region15: #{tpu_custom_call.1} parent=1 // pred_check_branch
      %50 = sbr.rel (0) target = $region17
    $region16: #{tpu_custom_call.1} parent=1 // pred_region
      _
    $region17: #{tpu_custom_call.1} parent=1 // pred_fallthru
      _
    // Predicated region
    $region18: #{tpu_custom_call.1} parent=1 // pred_check
      _
    $region19: #{tpu_custom_call.1} parent=1 // pred_check_branch
      %52 = sbr.rel (0) target = $region21
    $region20: #{tpu_custom_call.1} parent=1 // pred_region
      _
    $region21: #{tpu_custom_call.1} parent=1 // pred_fallthru
      _
    // Predicated region
    $region22: #{tpu_custom_call.1} parent=1 // pred_check
      _
    $region23: #{tpu_custom_call.1} parent=1 // pred_check_branch
      %54 = sbr.rel (0) target = $region25
    $region24: #{tpu_custom_call.1} parent=1 // pred_region
      %s56 = ssub.s32 16, 16
      %57 = vsyncadd [#allocation6], %s56
      %s59 = sshll.u32 [#allocation7], 4
      %s60 = int_to_ptr.vmem [resolvable:$true] %s59
      %62 = dma.hbm_to_vmem [thread:$0]  %s5, 16, %s60, [#allocation6]
    $region25: #{tpu_custom_call.1} parent=1 // pred_fallthru
      _
    // Predicated region
    $region26: #{tpu_custom_call.1} parent=1 // pred_check
      _
    $region27: #{tpu_custom_call.1} parent=1 // pred_check_branch
      %64 = sbr.rel (0) target = $region29
    $region28: #{tpu_custom_call.1} parent=1 // pred_region
      %s66 = ssub.s32 256, 256
      %67 = vsyncadd [#allocation9], %s66
      %s68 = sshll.u32 [#allocation8], 4
      %s69 = int_to_ptr.vmem [resolvable:$true] %s68
      %74 = dma.hbm_to_vmem [thread:$0]  %s6, 256, %s69, [#allocation9], 64, 64, 4
    $region29: #{tpu_custom_call.1} parent=1 // pred_fallthru
      _
    // Predicated region
    $region30: #{tpu_custom_call.1} parent=1 // pred_check
      _
    $region31: #{tpu_custom_call.1} parent=1 // pred_check_branch
      %76 = sbr.rel (0) target = $region33
    $region32: #{tpu_custom_call.1} parent=1 // pred_region
      %s78 = ssub.s32 16, 16
      %79 = vsyncadd [#allocation9], %s78
      %s81 = sshll.u32 [#allocation10], 4
      %s82 = int_to_ptr.vmem [resolvable:$true] %s81
      %84 = dma.hbm_to_vmem [thread:$0]  %s7, 16, %s82, [#allocation9]
    $region33: #{tpu_custom_call.1} parent=1 // pred_fallthru
      _
    // Predicated region
    $region34: #{tpu_custom_call.1} parent=1 // pred_check
      _
    $region35: #{tpu_custom_call.1} parent=1 // pred_check_branch
      %86 = sbr.rel (0) target = $region37
    $region36: #{tpu_custom_call.1} parent=1 // pred_region
      %s88 = ssub.s32 256, 256
      %89 = vsyncadd [#allocation12], %s88
      %s90 = sshll.u32 [#allocation11], 4
      %s91 = int_to_ptr.vmem [resolvable:$true] %s90
      %96 = dma.hbm_to_vmem [thread:$0]  %s8, 256, %s91, [#allocation12], 64, 64, 4
    $region37: #{tpu_custom_call.1} parent=1 // pred_fallthru
      _
    // Predicated region
    $region38: #{tpu_custom_call.1} parent=1 // pred_check
      _
    $region39: #{tpu_custom_call.1} parent=1 // pred_check_branch
      %98 = sbr.rel (0) target = $region41
    $region40: #{tpu_custom_call.1} parent=1 // pred_region
      %s100 = ssub.s32 16, 16
      %101 = vsyncadd [#allocation12], %s100
      %s103 = sshll.u32 [#allocation13], 4
      %s104 = int_to_ptr.vmem [resolvable:$true] %s103
      %106 = dma.hbm_to_vmem [thread:$0]  %s9, 16, %s104, [#allocation12]
    $region41: #{tpu_custom_call.1} parent=1 // pred_fallthru
      _
    // Predicated region
    $region42: #{tpu_custom_call.1} parent=1 // pred_check
      _
    $region43: #{tpu_custom_call.1} parent=1 // pred_check_branch
      %108 = sbr.rel (0) target = $region45
    $region44: #{tpu_custom_call.1} parent=1 // pred_region
      _
    $region45: #{tpu_custom_call.1} parent=1 // pred_fallthru
      _
    // Predicated region
    $region46: #{tpu_custom_call.1} parent=1 // pred_check
      _
    $region47: #{tpu_custom_call.1} parent=1 // pred_check_branch
      %110 = sbr.rel (0) target = $region49
    $region48: #{tpu_custom_call.1} parent=1 // pred_region
      %s112 = ssub.s32 16, 16
      %113 = vsyncadd [#allocation15], %s112
      %s115 = sshll.u32 [#allocation14], 4
      %s116 = int_to_ptr.vmem [resolvable:$true] %s115
      %118 = dma.hbm_to_vmem [thread:$0]  %s11, 16, %s116, [#allocation15]
    $region49: #{tpu_custom_call.1} parent=1 // pred_fallthru
      _
    // Predicated region
    $region50: #{tpu_custom_call.1} parent=1 // pred_check
      _
    $region51: #{tpu_custom_call.1} parent=1 // pred_check_branch
      %120 = sbr.rel (0) target = $region53
    $region52: #{tpu_custom_call.1} parent=1 // pred_region
      _
    $region53: #{tpu_custom_call.1} parent=1 // pred_fallthru
      _
    // Predicated region
    $region54: #{tpu_custom_call.1} parent=1 // pred_check
      _
    $region55: #{tpu_custom_call.1} parent=1 // pred_check_branch
      %122 = sbr.rel (0) target = $region57
    $region56: #{tpu_custom_call.1} parent=1 // pred_region
      _
    $region57: #{tpu_custom_call.1} parent=1 // pred_fallthru
      _
    // Predicated region
    $region58: #{tpu_custom_call.1} parent=1 // pred_check
      _
    $region59: #{tpu_custom_call.1} parent=1 // pred_check_branch
      %124 = sbr.rel (0) target = $region61
    $region60: #{tpu_custom_call.1} parent=1 // pred_region
      %125 = dma.done [#allocation3], 128
    $region61: #{tpu_custom_call.1} parent=1 // pred_fallthru
      _
    // Predicated region
    $region62: #{tpu_custom_call.1} parent=1 // pred_check
      _
    $region63: #{tpu_custom_call.1} parent=1 // pred_check_branch
      %127 = sbr.rel (0) target = $region65
    $region64: #{tpu_custom_call.1} parent=1 // pred_region
      %128 = dma.done [#allocation6], 128
    $region65: #{tpu_custom_call.1} parent=1 // pred_fallthru
      _
    // Predicated region
    $region66: #{tpu_custom_call.1} parent=1 // pred_check
      _
    $region67: #{tpu_custom_call.1} parent=1 // pred_check_branch
      %130 = sbr.rel (0) target = $region69
    $region68: #{tpu_custom_call.1} parent=1 // pred_region
      %131 = dma.done [#allocation6], 16
    $region69: #{tpu_custom_call.1} parent=1 // pred_fallthru
      _
    // Predicated region
    $region70: #{tpu_custom_call.1} parent=1 // pred_check
      _
    $region71: #{tpu_custom_call.1} parent=1 // pred_check_branch
      %133 = sbr.rel (0) target = $region73
    $region72: #{tpu_custom_call.1} parent=1 // pred_region
      %134 = dma.done [#allocation9], 256
    $region73: #{tpu_custom_call.1} parent=1 // pred_fallthru
      _
    // Predicated region
    $region74: #{tpu_custom_call.1} parent=1 // pred_check
      _
    $region75: #{tpu_custom_call.1} parent=1 // pred_check_branch
      %136 = sbr.rel (0) target = $region77
    $region76: #{tpu_custom_call.1} parent=1 // pred_region
      %137 = dma.done [#allocation9], 16
    $region77: #{tpu_custom_call.1} parent=1 // pred_fallthru
      _
    // Predicated region
    $region78: #{tpu_custom_call.1} parent=1 // pred_check
      _
    $region79: #{tpu_custom_call.1} parent=1 // pred_check_branch
      %139 = sbr.rel (0) target = $region81
    $region80: #{tpu_custom_call.1} parent=1 // pred_region
      %140 = dma.done [#allocation12], 256
    $region81: #{tpu_custom_call.1} parent=1 // pred_fallthru
      _
    // Predicated region
    $region82: #{tpu_custom_call.1} parent=1 // pred_check
      _
    $region83: #{tpu_custom_call.1} parent=1 // pred_check_branch
      %142 = sbr.rel (0) target = $region85
    $region84: #{tpu_custom_call.1} parent=1 // pred_region
      %143 = dma.done [#allocation12], 16
    $region85: #{tpu_custom_call.1} parent=1 // pred_fallthru
      _
    // Predicated region
    $region86: #{tpu_custom_call.1} parent=1 // pred_check
      _
    $region87: #{tpu_custom_call.1} parent=1 // pred_check_branch
      %145 = sbr.rel (0) target = $region89
    $region88: #{tpu_custom_call.1} parent=1 // pred_region
      %146 = dma.done [#allocation15], 16
    $region89: #{tpu_custom_call.1} parent=1 // pred_fallthru
      _
    %v148 = vld [vmem:[#allocation2] sm:$0xff]
    %v149 = vpack.c.bf16 %v148, %v148
    %v150 = vld [vmem:[%s1] sm:$0xff]
    %v151 = vpack.c.bf16 %v150, %v150
    %153 = vrot.lane.b32.xlu0 %v151, 12
    %v154 = vpop.permute.xlu0 %153
    %vm155 = vcmask 97280
    %v158 = vsel %vm155, %v149, %v154
    %v159 = vld [vmem:[#allocation5] sm:$0xf]
    %v160 = vld [vmem:[#allocation5 + $0x4] sm:$0xf]
    %v161 = vld [vmem:[%s3] sm:$0x1]
    %v163 = vlaneseq
    %v164 = vshrl.u32 %v163, 7
    %v165 = vsub.s32 0, %v164
    %v166 = vrot.slane %v161, %v165
    %v170 = vunpack.c.l.b16 %v159
    %v171 = vunpack.c.l.b16 %v160
    %v172 = vpack.c.b16 %v171, %v170
    %vm174 = vcmask 130048
    %v175 = vsel %vm174, %v158, 0
    %177 = vmatprep.subr.bf16.mxu0 0
    %178 = vmatpush1.bf16.msra.mxu0 0
    %179 = vmatprep.subr.bf16.mxu0 0
    %180 = vmatpush1.bf16.msra.mxu0 0
    %181 = vmatprep.subr.bf16.mxu0 0
    %182 = vmatpush1.bf16.msra.mxu0 0
    %183 = vmatprep.subr.bf16.mxu0 0
    %184 = vmatpush1.bf16.msra.mxu0 0
    %185 = vmatprep.subr.bf16.mxu0 0
    %186 = vmatpush1.bf16.msra.mxu0 0
    %187 = vmatprep.subr.bf16.mxu0 0
    %188 = vmatpush1.bf16.msra.mxu0 0
    %189 = vmatprep.subr.bf16.mxu0 0
    %190 = vmatpush1.bf16.msra.mxu0 0
    %191 = vmatprep.subr.bf16.mxu0 0
    %192 = vmatpush1.bf16.msra.mxu0 %v172
    %193 = vmatprep.subr.bf16.mxu0 0
    %194 = vmatpush2.bf16.msra.mxu0 0
    %195 = vmatprep.subr.bf16.mxu0 0
    %196 = vmatpush2.bf16.msra.mxu0 0
    %197 = vmatprep.subr.bf16.mxu0 0
    %198 = vmatpush2.bf16.msra.mxu0 0
    %199 = vmatprep.subr.bf16.mxu0 0
    %200 = vmatpush2.bf16.msra.mxu0 0
    %201 = vmatprep.subr.bf16.mxu0 0
    %202 = vmatpush2.bf16.msra.mxu0 0
    %203 = vmatprep.subr.bf16.mxu0 0
    %204 = vmatpush2.bf16.msra.mxu0 0
    %205 = vmatprep.subr.bf16.mxu0 0
    %206 = vmatpush2.bf16.msra.mxu0 0
    %207 = vmatprep.subr.bf16.mxu0 0
    %208 = vmatpush2.bf16.msra.mxu0 0
    %209 = vmatprep.mubr.bf16.mxu0 0
    %210 = vmatmul.mubr.bf16.gmra.mxu0 %v175
    %v211 = vpop.f32.mrf.mxu0
    %v212 = vadd.f32 %v166, %v211
    %v213 = vpop.f32.mrf.mxu0
    %v214 = vpop.f32.mrf.mxu0
    %v215 = vpop.f32.mrf.mxu0
    %216 = vdwg.mxu0
    %v217 = vmin.f32 %v212, 40.0
    %v218 = vmul.f32 %v217, 1.442695
    %v219 = vpow.pop %v218
    %v220 = vadd.f32 %v219, 2.0
    %v221 = vmul.f32 %v219, %v220
    %v222 = vmul.f32 %v212, %v221
    %v223 = vadd.f32 %v221, 2.0
    %v224 = vrcp.pop %v223
    %v225 = vmul.f32 %v222, %v224
    %v226 = vpack.c.bf16 %v225, %v225
    %v227 = vld [vmem:[%s4] sm:$0xf]
    %v228 = vld [vmem:[%s4 + $0x4] sm:$0xf]
    %v229 = vld [vmem:[%s4 + $0x8] sm:$0xf]
    %v230 = vld [vmem:[%s4 + $0xc] sm:$0xf]
    %v231 = vld [vmem:[#allocation7] sm:$0x1]
    %v233 = vlaneseq
    %v234 = vshrl.u32 %v233, 7
    %v235 = vsub.s32 0, %v234
    %v236 = vrot.slane %v231, %v235
    %v242 = vunpack.c.l.b16 %v227
    %v243 = vunpack.c.l.b16 %v228
    %v244 = vunpack.c.l.b16 %v229
    %v245 = vunpack.c.l.b16 %v230
    %v246 = vpack.c.b16 %v243, %v242
    %v247 = vpack.c.b16 %v245, %v244
    %vm250 = vcmask 261120
    %v252 = vsel %vm250, %v226, 0
    %254 = vmatprep.subr.bf16.mxu0 0
    %255 = vmatpush1.bf16.msra.mxu0 0
    %256 = vmatprep.subr.bf16.mxu0 0
    %257 = vmatpush1.bf16.msra.mxu0 0
    %258 = vmatprep.subr.bf16.mxu0 0
    %259 = vmatpush1.bf16.msra.mxu0 0
    %260 = vmatprep.subr.bf16.mxu0 0
    %261 = vmatpush1.bf16.msra.mxu0 0
    %262 = vmatprep.subr.bf16.mxu0 0
    %263 = vmatpush1.bf16.msra.mxu0 0
    %264 = vmatprep.subr.bf16.mxu0 0
    %265 = vmatpush1.bf16.msra.mxu0 0
    %266 = vmatprep.subr.bf16.mxu0 0
    %267 = vmatpush1.bf16.msra.mxu0 %v247
    %268 = vmatprep.subr.bf16.mxu0 0
    %269 = vmatpush1.bf16.msra.mxu0 %v246
    %270 = vmatprep.subr.bf16.mxu0 0
    %271 = vmatpush2.bf16.msra.mxu0 0
    %272 = vmatprep.subr.bf16.mxu0 0
    %273 = vmatpush2.bf16.msra.mxu0 0
    %274 = vmatprep.subr.bf16.mxu0 0
    %275 = vmatpush2.bf16.msra.mxu0 0
    %276 = vmatprep.subr.bf16.mxu0 0
    %277 = vmatpush2.bf16.msra.mxu0 0
    %278 = vmatprep.subr.bf16.mxu0 0
    %279 = vmatpush2.bf16.msra.mxu0 0
    %280 = vmatprep.subr.bf16.mxu0 0
    %281 = vmatpush2.bf16.msra.mxu0 0
    %282 = vmatprep.subr.bf16.mxu0 0
    %283 = vmatpush2.bf16.msra.mxu0 0
    %284 = vmatprep.subr.bf16.mxu0 0
    %285 = vmatpush2.bf16.msra.mxu0 0
    %286 = vmatprep.mubr.bf16.mxu0 0
    %287 = vmatmul.mubr.bf16.gmra.mxu0 %v252
    %v288 = vpop.f32.mrf.mxu0
    %v289 = vadd.f32 %v236, %v288
    %v290 = vpop.f32.mrf.mxu0
    %v291 = vpop.f32.mrf.mxu0
    %v292 = vpop.f32.mrf.mxu0
    %293 = vdwg.mxu0
    %v294 = vmin.f32 %v289, 40.0
    %v295 = vmul.f32 %v294, 1.442695
    %v296 = vpow.pop %v295
    %v297 = vadd.f32 %v296, 2.0
    %v298 = vmul.f32 %v296, %v297
    %v299 = vmul.f32 %v289, %v298
    %v300 = vadd.f32 %v298, 2.0
    %v301 = vrcp.pop %v300
    %v302 = vmul.f32 %v299, %v301
    %v303 = vpack.c.bf16 %v302, %v302
    %v304 = vld [vmem:[#allocation8] sm:$0xf]
    %v305 = vld [vmem:[#allocation8 + $0x4] sm:$0xf]
    %v306 = vld [vmem:[#allocation8 + $0x8] sm:$0xf]
    %v307 = vld [vmem:[#allocation8 + $0xc] sm:$0xf]
    %v308 = vld [vmem:[#allocation10] sm:$0x1]
    %v310 = vlaneseq
    %v311 = vshrl.u32 %v310, 7
    %v312 = vsub.s32 0, %v311
    %v313 = vrot.slane %v308, %v312
    %316 = vrot.lane.b32.xlu0 %v226, 96
    %v317 = vpop.permute.xlu0 %316
    %v322 = vunpack.c.l.b16 %v304
    %v323 = vunpack.c.l.b16 %v305
    %v324 = vunpack.c.l.b16 %v306
    %v325 = vunpack.c.l.b16 %v307
    %v326 = vpack.c.b16 %v323, %v322
    %v327 = vpack.c.b16 %v325, %v324
    %v331 = vsel %vm250, %v317, 0
    %333 = vmatprep.subr.bf16.mxu0 0
    %334 = vmatpush1.bf16.msra.mxu0 0
    %335 = vmatprep.subr.bf16.mxu0 0
    %336 = vmatpush1.bf16.msra.mxu0 0
    %337 = vmatprep.subr.bf16.mxu0 0
    %338 = vmatpush1.bf16.msra.mxu0 0
    %339 = vmatprep.subr.bf16.mxu0 0
    %340 = vmatpush1.bf16.msra.mxu0 0
    %341 = vmatprep.subr.bf16.mxu0 0
    %342 = vmatpush1.bf16.msra.mxu0 0
    %343 = vmatprep.subr.bf16.mxu0 0
    %344 = vmatpush1.bf16.msra.mxu0 0
    %345 = vmatprep.subr.bf16.mxu0 0
    %346 = vmatpush1.bf16.msra.mxu0 %v327
    %347 = vmatprep.subr.bf16.mxu0 0
    %348 = vmatpush1.bf16.msra.mxu0 %v326
    %349 = vmatprep.subr.bf16.mxu0 0
    %350 = vmatpush2.bf16.msra.mxu0 0
    %351 = vmatprep.subr.bf16.mxu0 0
    %352 = vmatpush2.bf16.msra.mxu0 0
    %353 = vmatprep.subr.bf16.mxu0 0
    %354 = vmatpush2.bf16.msra.mxu0 0
    %355 = vmatprep.subr.bf16.mxu0 0
    %356 = vmatpush2.bf16.msra.mxu0 0
    %357 = vmatprep.subr.bf16.mxu0 0
    %358 = vmatpush2.bf16.msra.mxu0 0
    %359 = vmatprep.subr.bf16.mxu0 0
    %360 = vmatpush2.bf16.msra.mxu0 0
    %361 = vmatprep.subr.bf16.mxu0 0
    %362 = vmatpush2.bf16.msra.mxu0 0
    %363 = vmatprep.subr.bf16.mxu0 0
    %364 = vmatpush2.bf16.msra.mxu0 0
    %365 = vmatprep.mubr.bf16.mxu0 0
    %366 = vmatmul.mubr.bf16.gmra.mxu0 %v331
    %v367 = vpop.f32.mrf.mxu0
    %v368 = vadd.f32 %v313, %v367
    %v369 = vpop.f32.mrf.mxu0
    %v370 = vpop.f32.mrf.mxu0
    %v371 = vpop.f32.mrf.mxu0
    %372 = vdwg.mxu0
    %v373 = vmin.f32 %v368, 40.0
    %v374 = vmul.f32 %v373, 1.442695
    %v375 = vpow.pop %v374
    %v376 = vadd.f32 %v375, 2.0
    %v377 = vmul.f32 %v375, %v376
    %v378 = vmul.f32 %v368, %v377
    %v379 = vadd.f32 %v377, 2.0
    %v380 = vrcp.pop %v379
    %v381 = vmul.f32 %v378, %v380
    %v382 = vpack.c.bf16 %v381, %v381
    %v383 = vld [vmem:[#allocation11] sm:$0xf]
    %v384 = vld [vmem:[#allocation11 + $0x4] sm:$0xf]
    %v385 = vld [vmem:[#allocation11 + $0x8] sm:$0xf]
    %v386 = vld [vmem:[#allocation11 + $0xc] sm:$0xf]
    %v387 = vld [vmem:[#allocation13] sm:$0x1]
    %v389 = vlaneseq
    %v390 = vshrl.u32 %v389, 7
    %v391 = vsub.s32 0, %v390
    %v392 = vrot.slane %v387, %v391
    %v398 = vunpack.c.l.b16 %v383
    %v399 = vunpack.c.l.b16 %v384
    %v400 = vunpack.c.l.b16 %v385
    %v401 = vunpack.c.l.b16 %v386
    %v402 = vpack.c.b16 %v399, %v398
    %v403 = vpack.c.b16 %v401, %v400
    %v407 = vsel %vm250, %v303, 0
    %409 = vmatprep.subr.bf16.mxu0 0
    %410 = vmatpush1.bf16.msra.mxu0 0
    %411 = vmatprep.subr.bf16.mxu0 0
    %412 = vmatpush1.bf16.msra.mxu0 0
    %413 = vmatprep.subr.bf16.mxu0 0
    %414 = vmatpush1.bf16.msra.mxu0 0
    %415 = vmatprep.subr.bf16.mxu0 0
    %416 = vmatpush1.bf16.msra.mxu0 0
    %417 = vmatprep.subr.bf16.mxu0 0
    %418 = vmatpush1.bf16.msra.mxu0 0
    %419 = vmatprep.subr.bf16.mxu0 0
    %420 = vmatpush1.bf16.msra.mxu0 0
    %421 = vmatprep.subr.bf16.mxu0 0
    %422 = vmatpush1.bf16.msra.mxu0 %v403
    %423 = vmatprep.subr.bf16.mxu0 0
    %424 = vmatpush1.bf16.msra.mxu0 %v402
    %425 = vmatprep.subr.bf16.mxu0 0
    %426 = vmatpush2.bf16.msra.mxu0 0
    %427 = vmatprep.subr.bf16.mxu0 0
    %428 = vmatpush2.bf16.msra.mxu0 0
    %429 = vmatprep.subr.bf16.mxu0 0
    %430 = vmatpush2.bf16.msra.mxu0 0
    %431 = vmatprep.subr.bf16.mxu0 0
    %432 = vmatpush2.bf16.msra.mxu0 0
    %433 = vmatprep.subr.bf16.mxu0 0
    %434 = vmatpush2.bf16.msra.mxu0 0
    %435 = vmatprep.subr.bf16.mxu0 0
    %436 = vmatpush2.bf16.msra.mxu0 0
    %437 = vmatprep.subr.bf16.mxu0 0
    %438 = vmatpush2.bf16.msra.mxu0 0
    %439 = vmatprep.subr.bf16.mxu0 0
    %440 = vmatpush2.bf16.msra.mxu0 0
    %441 = vmatprep.mubr.bf16.mxu0 0
    %442 = vmatmul.mubr.bf16.gmra.mxu0 %v407
    %v443 = vpop.f32.mrf.mxu0
    %v444 = vadd.f32 %v392, %v443
    %v445 = vpop.f32.mrf.mxu0
    %v446 = vpop.f32.mrf.mxu0
    %v447 = vpop.f32.mrf.mxu0
    %448 = vdwg.mxu0
    %v449 = vmin.f32 %v444, 40.0
    %v450 = vmul.f32 %v449, 1.442695
    %v451 = vpow.pop %v450
    %v452 = vadd.f32 %v451, 2.0
    %v453 = vmul.f32 %v451, %v452
    %v454 = vmul.f32 %v444, %v453
    %v455 = vadd.f32 %v453, 2.0
    %v456 = vrcp.pop %v455
    %v457 = vmul.f32 %v454, %v456
    %v458 = vld [vmem:[%s10] sm:$0xf]
    %v459 = vld [vmem:[%s10 + $0x4] sm:$0xf]
    %v460 = vld [vmem:[%s10 + $0x8] sm:$0xf]
    %v461 = vld [vmem:[%s10 + $0xc] sm:$0xf]
    %v462 = vld [vmem:[#allocation14] sm:$0x1]
    %v464 = vlaneseq
    %v465 = vshrl.u32 %v464, 7
    %v466 = vsub.s32 0, %v465
    %v467 = vrot.slane %v462, %v466
    %v473 = vunpack.c.l.b16 %v458
    %v474 = vunpack.c.l.b16 %v459
    %v475 = vunpack.c.l.b16 %v460
    %v476 = vunpack.c.l.b16 %v461
    %v477 = vpack.c.b16 %v474, %v473
    %v478 = vpack.c.b16 %v476, %v475
    %v482 = vsel %vm250, %v382, 0
    %484 = vmatprep.subr.bf16.mxu0 0
    %485 = vmatpush1.bf16.msra.mxu0 0
    %486 = vmatprep.subr.bf16.mxu0 0
    %487 = vmatpush1.bf16.msra.mxu0 0
    %488 = vmatprep.subr.bf16.mxu0 0
    %489 = vmatpush1.bf16.msra.mxu0 0
    %490 = vmatprep.subr.bf16.mxu0 0
    %491 = vmatpush1.bf16.msra.mxu0 0
    %492 = vmatprep.subr.bf16.mxu0 0
    %493 = vmatpush1.bf16.msra.mxu0 0
    %494 = vmatprep.subr.bf16.mxu0 0
    %495 = vmatpush1.bf16.msra.mxu0 0
    %496 = vmatprep.subr.bf16.mxu0 0
    %497 = vmatpush1.bf16.msra.mxu0 %v478
    %498 = vmatprep.subr.bf16.mxu0 0
    %499 = vmatpush1.bf16.msra.mxu0 %v477
    %500 = vmatprep.subr.bf16.mxu0 0
    %501 = vmatpush2.bf16.msra.mxu0 0
    %502 = vmatprep.subr.bf16.mxu0 0
    %503 = vmatpush2.bf16.msra.mxu0 0
    %504 = vmatprep.subr.bf16.mxu0 0
    %505 = vmatpush2.bf16.msra.mxu0 0
    %506 = vmatprep.subr.bf16.mxu0 0
    %507 = vmatpush2.bf16.msra.mxu0 0
    %508 = vmatprep.subr.bf16.mxu0 0
    %509 = vmatpush2.bf16.msra.mxu0 0
    %510 = vmatprep.subr.bf16.mxu0 0
    %511 = vmatpush2.bf16.msra.mxu0 0
    %512 = vmatprep.subr.bf16.mxu0 0
    %513 = vmatpush2.bf16.msra.mxu0 0
    %514 = vmatprep.subr.bf16.mxu0 0
    %515 = vmatpush2.bf16.msra.mxu0 0
    %516 = vmatprep.mubr.bf16.mxu0 0
    %517 = vmatmul.mubr.bf16.gmra.mxu0 %v482
    %v518 = vpop.f32.mrf.mxu0
    %v519 = vadd.f32 %v467, %v518
    %v520 = vpop.f32.mrf.mxu0
    %v521 = vpop.f32.mrf.mxu0
    %v522 = vpop.f32.mrf.mxu0
    %523 = vdwg.mxu0
    %v524 = vmin.f32 %v519, 40.0
    %v525 = vmul.f32 %v524, 1.442695
    %v526 = vpow.pop %v525
    %v527 = vadd.f32 %v526, 2.0
    %v528 = vmul.f32 %v526, %v527
    %v529 = vmul.f32 %v519, %v528
    %v530 = vadd.f32 %v528, 2.0
    %v531 = vrcp.pop %v530
    %v532 = vmul.f32 %v529, %v531
    %v533 = vld [vmem:[%s12] sm:$0x1]
    %v535 = vsel %vm250, %v533, 0
    %v538 = vsel %vm250, %v457, 0
    %540 = vmatprep.subr.mxu0 0.0
    %541 = vmatpush1.xpose.msra.mxu0 0.0
    %542 = vmatprep.subr.mxu0 0.0
    %543 = vmatpush1.xpose.msra.mxu0 0.0
    %544 = vmatprep.subr.mxu0 0.0
    %545 = vmatpush1.xpose.msra.mxu0 0.0
    %546 = vmatprep.subr.mxu0 0.0
    %547 = vmatpush1.xpose.msra.mxu0 0.0
    %548 = vmatprep.subr.mxu0 0.0
    %549 = vmatpush1.xpose.msra.mxu0 0.0
    %550 = vmatprep.subr.mxu0 0.0
    %551 = vmatpush1.xpose.msra.mxu0 0.0
    %552 = vmatprep.subr.mxu0 0.0
    %553 = vmatpush1.xpose.msra.mxu0 0.0
    %554 = vmatprep.subr.mxu0 0.0
    %555 = vmatpush1.xpose.msra.mxu0 0.0
    %556 = vmatprep.subr.mxu0 0.0
    %557 = vmatpush1.xpose.msra.mxu0 0.0
    %558 = vmatprep.subr.mxu0 0.0
    %559 = vmatpush1.xpose.msra.mxu0 0.0
    %560 = vmatprep.subr.mxu0 0.0
    %561 = vmatpush1.xpose.msra.mxu0 0.0
    %562 = vmatprep.subr.mxu0 0.0
    %563 = vmatpush1.xpose.msra.mxu0 0.0
    %564 = vmatprep.subr.mxu0 0.0
    %565 = vmatpush1.xpose.msra.mxu0 0.0
    %566 = vmatprep.subr.mxu0 0.0
    %567 = vmatpush1.xpose.msra.mxu0 0.0
    %568 = vmatprep.subr.mxu0 0.0
    %569 = vmatpush1.xpose.msra.mxu0 0.0
    %570 = vmatprep.subr.mxu0 0.0
    %571 = vmatpush1.xpose.msra.mxu0 %v538
    %572 = vmatprep.subr.mxu0 0.0
    %573 = vmatpush2.xpose.msra.mxu0 0.0
    %574 = vmatprep.subr.mxu0 0.0
    %575 = vmatpush2.xpose.msra.mxu0 0.0
    %576 = vmatprep.subr.mxu0 0.0
    %577 = vmatpush2.xpose.msra.mxu0 0.0
    %578 = vmatprep.subr.mxu0 0.0
    %579 = vmatpush2.xpose.msra.mxu0 0.0
    %580 = vmatprep.subr.mxu0 0.0
    %581 = vmatpush2.xpose.msra.mxu0 0.0
    %582 = vmatprep.subr.mxu0 0.0
    %583 = vmatpush2.xpose.msra.mxu0 0.0
    %584 = vmatprep.subr.mxu0 0.0
    %585 = vmatpush2.xpose.msra.mxu0 0.0
    %586 = vmatprep.subr.mxu0 0.0
    %587 = vmatpush2.xpose.msra.mxu0 0.0
    %588 = vmatprep.subr.mxu0 0.0
    %589 = vmatpush2.xpose.msra.mxu0 0.0
    %590 = vmatprep.subr.mxu0 0.0
    %591 = vmatpush2.xpose.msra.mxu0 0.0
    %592 = vmatprep.subr.mxu0 0.0
    %593 = vmatpush2.xpose.msra.mxu0 0.0
    %594 = vmatprep.subr.mxu0 0.0
    %595 = vmatpush2.xpose.msra.mxu0 0.0
    %596 = vmatprep.subr.mxu0 0.0
    %597 = vmatpush2.xpose.msra.mxu0 0.0
    %598 = vmatprep.subr.mxu0 0.0
    %599 = vmatpush2.xpose.msra.mxu0 0.0
    %600 = vmatprep.subr.mxu0 0.0
    %601 = vmatpush2.xpose.msra.mxu0 0.0
    %602 = vmatprep.subr.mxu0 0.0
    %603 = vmatpush2.xpose.msra.mxu0 0.0
    %604 = vmatprep.mubr.f32.mxu0 0.0
    %605 = vmatmul.mubr.f32.gmra.mxu0 %v535
    %v606 = vpop.f32.mrf.mxu0
    %v607 = vadd.f32 0.0, %v606
    %v608 = vpop.f32.mrf.mxu0
    %609 = vdwg.mxu0
    %v610 = vld [vmem:[%s12 + $0x1] sm:$0x1]
    %v612 = vsel %vm250, %v610, 0
    %v615 = vsel %vm250, %v532, 0
    %617 = vmatprep.subr.mxu0 0.0
    %618 = vmatpush1.xpose.msra.mxu0 0.0
    %619 = vmatprep.subr.mxu0 0.0
    %620 = vmatpush1.xpose.msra.mxu0 0.0
    %621 = vmatprep.subr.mxu0 0.0
    %622 = vmatpush1.xpose.msra.mxu0 0.0
    %623 = vmatprep.subr.mxu0 0.0
    %624 = vmatpush1.xpose.msra.mxu0 0.0
    %625 = vmatprep.subr.mxu0 0.0
    %626 = vmatpush1.xpose.msra.mxu0 0.0
    %627 = vmatprep.subr.mxu0 0.0
    %628 = vmatpush1.xpose.msra.mxu0 0.0
    %629 = vmatprep.subr.mxu0 0.0
    %630 = vmatpush1.xpose.msra.mxu0 0.0
    %631 = vmatprep.subr.mxu0 0.0
    %632 = vmatpush1.xpose.msra.mxu0 0.0
    %633 = vmatprep.subr.mxu0 0.0
    %634 = vmatpush1.xpose.msra.mxu0 0.0
    %635 = vmatprep.subr.mxu0 0.0
    %636 = vmatpush1.xpose.msra.mxu0 0.0
    %637 = vmatprep.subr.mxu0 0.0
    %638 = vmatpush1.xpose.msra.mxu0 0.0
    %639 = vmatprep.subr.mxu0 0.0
    %640 = vmatpush1.xpose.msra.mxu0 0.0
    %641 = vmatprep.subr.mxu0 0.0
    %642 = vmatpush1.xpose.msra.mxu0 0.0
    %643 = vmatprep.subr.mxu0 0.0
    %644 = vmatpush1.xpose.msra.mxu0 0.0
    %645 = vmatprep.subr.mxu0 0.0
    %646 = vmatpush1.xpose.msra.mxu0 0.0
    %647 = vmatprep.subr.mxu0 0.0
    %648 = vmatpush1.xpose.msra.mxu0 %v615
    %649 = vmatprep.subr.mxu0 0.0
    %650 = vmatpush2.xpose.msra.mxu0 0.0
    %651 = vmatprep.subr.mxu0 0.0
    %652 = vmatpush2.xpose.msra.mxu0 0.0
    %653 = vmatprep.subr.mxu0 0.0
    %654 = vmatpush2.xpose.msra.mxu0 0.0
    %655 = vmatprep.subr.mxu0 0.0
    %656 = vmatpush2.xpose.msra.mxu0 0.0
    %657 = vmatprep.subr.mxu0 0.0
    %658 = vmatpush2.xpose.msra.mxu0 0.0
    %659 = vmatprep.subr.mxu0 0.0
    %660 = vmatpush2.xpose.msra.mxu0 0.0
    %661 = vmatprep.subr.mxu0 0.0
    %662 = vmatpush2.xpose.msra.mxu0 0.0
    %663 = vmatprep.subr.mxu0 0.0
    %664 = vmatpush2.xpose.msra.mxu0 0.0
    %665 = vmatprep.subr.mxu0 0.0
    %666 = vmatpush2.xpose.msra.mxu0 0.0
    %667 = vmatprep.subr.mxu0 0.0
    %668 = vmatpush2.xpose.msra.mxu0 0.0
    %669 = vmatprep.subr.mxu0 0.0
    %670 = vmatpush2.xpose.msra.mxu0 0.0
    %671 = vmatprep.subr.mxu0 0.0
    %672 = vmatpush2.xpose.msra.mxu0 0.0
    %673 = vmatprep.subr.mxu0 0.0
    %674 = vmatpush2.xpose.msra.mxu0 0.0
    %675 = vmatprep.subr.mxu0 0.0
    %676 = vmatpush2.xpose.msra.mxu0 0.0
    %677 = vmatprep.subr.mxu0 0.0
    %678 = vmatpush2.xpose.msra.mxu0 0.0
    %679 = vmatprep.subr.mxu0 0.0
    %680 = vmatpush2.xpose.msra.mxu0 0.0
    %681 = vmatprep.mubr.f32.mxu0 0.0
    %682 = vmatmul.mubr.f32.gmra.mxu0 %v612
    %v683 = vpop.f32.mrf.mxu0
    %v684 = vadd.f32 0.0, %v683
    %v685 = vpop.f32.mrf.mxu0
    %686 = vdwg.mxu0
    %v688 = vrot.slane %v684, 7
    %vm690 = vcmask 1040384
    %v691 = vsel %vm690, %v607, %v688
    %v692 = vld [vmem:[%s13] sm:$0x3]
    %694 = vset.pattern.permute.xlu0 0
    %695 = vperm.xlu0 %694, %v692
    %v696 = vpop.permute.xlu0 %695
    %v698 = vadd.f32 %v691, %v696
    %vm699 = vcmask 58368
    %700 = vst.msk [vmem:[#allocation16] sm:$0x3] %vm699, %v698
    // Predicated region
    $region90: #{tpu_custom_call.1} parent=1 // pred_check
      _
    $region91: #{tpu_custom_call.1} parent=1 // pred_check_branch
      %702 = sbr.rel (0) target = $region93
    $region92: #{tpu_custom_call.1} parent=1 // pred_region
      %s704 = ssub.s32 32, 32
      %705 = vsyncadd [#allocation4], %s704
      %s707 = sshll.u32 [#allocation16], 4
      %s708 = int_to_ptr.vmem [resolvable:$true] %s707
      %710 = dma.vmem_to_hbm [thread:$0]  %s708, 32, %s14, [#allocation4]
    $region93: #{tpu_custom_call.1} parent=1 // pred_fallthru
      _
    // Predicated region
    $region94: #{tpu_custom_call.1} parent=1 // pred_check
      _
    $region95: #{tpu_custom_call.1} parent=1 // pred_check_branch
      %712 = sbr.rel (0) target = $region97
    $region96: #{tpu_custom_call.1} parent=1 // pred_region
      %713 = dma.done [#allocation4], 32
    $region97: #{tpu_custom_call.1} parent=1 // pred_fallthru
      _
    %714 = vsyncpa [#allocation3], 1
    %715 = vsyncpa [#allocation6], 1
    %716 = vsyncpa [#allocation9], 1
    %717 = vsyncpa [#allocation12], 1
    %718 = vsyncpa [#allocation15], 1
    %719 = vsyncpa [#allocation4], 1

</llo_original>
